<compile_context>
chip_gen: v7x
topology: tpu7x:2x2x1
jax: 0.10.0
libtpu: 0.0.40
codegen_flags: <defaults>
</compile_context>

<pallas_src>
import functools

import jax
import jax.numpy as jnp
from jax.experimental import pallas as pl
from jax.experimental.pallas import tpu as pltpu


def _round_up(n, m):
    return ((n + m - 1) // m) * m


@functools.lru_cache(maxsize=None)
def _tpu_defaults():
    """Return (batch-tile cap, target grid steps, elementwise dtype)."""
    kind = ""
    try:
        kind = jax.devices()[0].device_kind.lower()
    except Exception:
        pass
    if "v5" in kind:
        # v5e: 16 MiB scoped-VMEM default, no bf16 VPU -> f32 elementwise.
        return 8192, 2, jnp.float32
    if "v7" in kind or "tpu7" in kind:
        # v7x: 2 TensorCores -> >=2 steps per core; 32 MiB scoped / 64 MiB
        # physical VMEM, so do not inflate the tile further.
        return 16384, 4, jnp.bfloat16
    if "v6" in kind:
        # v6e: 32 MiB scoped default comfortably holds tb=16384 intermediates.
        return 16384, 2, jnp.bfloat16
    return 8192, 2, jnp.bfloat16


def attention_net_kernel(x_ref, w1_ref, w2_ref, b2_ref, w3_ref, b3_ref, o_ref,
                         *, ew_dtype):
    cd = w1_ref.dtype                       # matmul-operand dtype (bf16)
    x = x_ref[...]                          # [F_pad, tb]; ones row folds b1

    # fc1 (+ folded bias): [128, F_pad] @ [F_pad, tb] -> f32 accumulate.
    h1 = jnp.dot(w1_ref[...], x, preferred_element_type=jnp.float32)
    h1 = jnp.maximum(h1.astype(ew_dtype), 0.0)

    # fc2: [64, 128] @ [128, tb] -> f32 accumulate; bias/ReLU in ew_dtype.
    h2 = jnp.dot(w2_ref[...], h1.astype(cd), preferred_element_type=jnp.float32)
    h2 = jnp.maximum(h2.astype(ew_dtype) + b2_ref[...], 0.0)

    # fc3: [1, 64] @ [64, tb] -> [1, tb]; bias/ReLU in f32 (lane-dense row).
    att = jnp.dot(w3_ref[...], h2.astype(cd), preferred_element_type=jnp.float32)
    att = jnp.maximum(att + b3_ref[...], 0.0)
    o_ref[...] = att.astype(o_ref.dtype)


def prepare_params(params, *, compute_dtype=jnp.bfloat16):
    """One-time parameter prep: fold b1 into w1 (ones-row trick) and pre-cast
    everything to the kernel dtypes so the per-call wrapper emits no casts."""
    _, _, ew_dtype = _tpu_defaults()
    w1, b1, w2, b2, w3, b3 = params
    H1, F = w1.shape
    F_pad = _round_up(F + 1, 8)
    w1a = jnp.zeros((H1, F_pad), jnp.float32)
    w1a = w1a.at[:, :F].set(w1)
    w1a = w1a.at[:, F].set(b1[:, 0])
    return (w1a.astype(compute_dtype),
            w2.astype(compute_dtype),
            b2.astype(ew_dtype),
            w3.astype(compute_dtype),
            b3.astype(jnp.float32))


def attention_net_forward(x, prepared_params, *, compute_dtype=jnp.bfloat16):
    """x: [B, state_dim] float32.  prepared_params from prepare_params().
    Returns attention: [B, 1] float32."""
    w1a, w2c, b2c, w3c, b3f = prepared_params
    B, F = x.shape
    H1, F_pad = w1a.shape
    H2 = w2c.shape[0]
    O = w3c.shape[0]
    assert F_pad == _round_up(F + 1, 8), "params prepared for different F"

    tb_cap, target_steps, ew_dtype = _tpu_defaults()

    # Batch tile: scale with B so the grid has ~target_steps steps, lane-
    # aligned to 128, capped so intermediates stay inside scoped VMEM.
    tb = _round_up(pl.cdiv(B, target_steps), 128)
    tb = max(128, min(tb, tb_cap))
    B_pad = _round_up(B, tb)

    # Feature-major bf16 input with appended ones row (folds fc1 bias);
    # the cast fuses into the pad/transpose XLA already emits here.
    xt = jnp.zeros((F_pad, B_pad), compute_dtype)
    xt = xt.at[:F, :B].set(x.T.astype(compute_dtype))
    xt = xt.at[F, :B].set(1.0)

    kernel = functools.partial(attention_net_kernel, ew_dtype=ew_dtype)
    full = lambda shape: pl.BlockSpec(shape, lambda i: (0,) * len(shape))

    out = pl.pallas_call(
        kernel,
        out_shape=jax.ShapeDtypeStruct((O, B_pad), jnp.float32),
        grid_spec=pltpu.PrefetchScalarGridSpec(
            num_scalar_prefetch=0,
            grid=(B_pad // tb,),
            in_specs=[
                pl.BlockSpec((F_pad, tb), lambda i: (0, i)),  # x tile
                full((H1, F_pad)),                            # fc1 w (+bias)
                full((H2, H1)), full((H2, 1)),                # fc2 w, b
                full((O, H2)), full((O, 1)),                  # fc3 w, b
            ],
            out_specs=pl.BlockSpec((O, tb), lambda i: (0, i)),
        ),
        compiler_params=pltpu.CompilerParams(
            dimension_semantics=("parallel",)),
    )(xt, w1a, w2c, b2c, w3c, b3f)

    return out[:, :B].T   # [B, 1] f32


def init_params(key, state_dim):
    """Deterministic synthetic parameters, PyTorch-native [out, in] layout."""
    ks = jax.random.split(key, 6)
    w1 = jax.random.normal(ks[0], (128, state_dim), jnp.float32) * 0.1
    b1 = jax.random.normal(ks[1], (128, 1), jnp.float32) * 0.1
    w2 = jax.random.normal(ks[2], (64, 128), jnp.float32) * 0.1
    b2 = jax.random.normal(ks[3], (64, 1), jnp.float32) * 0.1
    w3 = jax.random.normal(ks[4], (1, 64), jnp.float32) * 0.1
    b3 = jax.random.normal(ks[5], (1, 1), jnp.float32) * 0.1
    return (w1, b1, w2, b2, w3, b3)


def reference_forward(x, params):
    w1, b1, w2, b2, w3, b3 = params
    h1 = jnp.maximum(x @ w1.T + b1.T, 0.0)
    h2 = jnp.maximum(h1 @ w2.T + b2.T, 0.0)
    return jnp.maximum(h2 @ w3.T + b3.T, 0.0)


if __name__ == "__main__":
    key = jax.random.PRNGKey(0)
    k_x, k_x2, k_p = jax.random.split(key, 3)

    state_dim = 4   # CartPole observation: state_shape = (4,)
    params = init_params(k_p, state_dim)
    prepared = prepare_params(params)

    # Small batch (CartPole replay-minibatch regime).
    x = jax.random.normal(k_x, (8, state_dim), jnp.float32)
    out = jax.block_until_ready(attention_net_forward(x, prepared))
    ref = reference_forward(x, params)
    assert out.shape == (8, 1)
    # bf16 matmul operands / folded bias with f32 accumulation -> loosened tol.
    assert jnp.allclose(out, ref, atol=3e-2, rtol=3e-2), (
        f"max abs err {float(jnp.max(jnp.abs(out - ref)))}")

    # Batch that is not a multiple of the tile: exercises multi-step grid
    # and the padded-column slice-off path.
    x2 = jax.random.normal(k_x2, (300, state_dim), jnp.float32)
    out2 = jax.block_until_ready(attention_net_forward(x2, prepared))
    ref2 = reference_forward(x2, params)
    assert out2.shape == (300, 1)
    assert jnp.allclose(out2, ref2, atol=3e-2, rtol=3e-2), (
        f"max abs err {float(jnp.max(jnp.abs(out2 - ref2)))}")

    print("KERNEL_OK")
</pallas_src>

<mosaic_0001>
module attributes {stable_mosaic.version = 11 : i64} {
  func.func @attention_net_kernel(%arg0: i32, %arg1: memref<8x128xbf16, #tpu.memory_space<vmem>>, %arg2: memref<128x8xbf16, #tpu.memory_space<vmem>>, %arg3: memref<64x128xbf16, #tpu.memory_space<vmem>>, %arg4: memref<64x1xbf16, #tpu.memory_space<vmem>>, %arg5: memref<1x64xbf16, #tpu.memory_space<vmem>>, %arg6: memref<1x1xf32, #tpu.memory_space<vmem>>, %arg7: memref<1x128xf32, #tpu.memory_space<vmem>>) attributes {dimension_semantics = [#tpu.dimension_semantics<parallel>], iteration_bounds = array<i64: 1>, scalar_prefetch = 0 : i64, scratch_operands = 0 : i64, tpu.core_type = #tpu.core_type<tc>, window_params = [{transform_indices = @transform_0, window_bounds = array<i64: 8, 128>}, {pipeline_mode = #tpu.pipeline_mode<synchronous>, transform_indices = @transform_1, window_bounds = array<i64: 128, 8>}, {pipeline_mode = #tpu.pipeline_mode<synchronous>, transform_indices = @transform_2, window_bounds = array<i64: 64, 128>}, {pipeline_mode = #tpu.pipeline_mode<synchronous>, transform_indices = @transform_3, window_bounds = array<i64: 64, 1>}, {pipeline_mode = #tpu.pipeline_mode<synchronous>, transform_indices = @transform_4, window_bounds = array<i64: 1, 64>}, {pipeline_mode = #tpu.pipeline_mode<synchronous>, transform_indices = @transform_5, window_bounds = array<i64: 1, 1>}, {transform_indices = @transform_6, window_bounds = array<i64: 1, 128>}]} {
    %c0 = arith.constant 0 : index
    %c0_0 = arith.constant 0 : index
    %0 = vector.load %arg1[%c0, %c0_0] : memref<8x128xbf16, #tpu.memory_space<vmem>>, vector<8x128xbf16>
    %c0_1 = arith.constant 0 : index
    %c0_2 = arith.constant 0 : index
    %1 = vector.load %arg2[%c0_1, %c0_2] : memref<128x8xbf16, #tpu.memory_space<vmem>>, vector<128x8xbf16>
    %cst = arith.constant dense<0.000000e+00> : vector<128x128xf32>
    %2 = tpu.matmul %1, %0, %cst {dimension_numbers = #tpu.dot_dimension_numbers<[1], [0], [0], [1], [0, 0, 1, 1], [], []>} : vector<128x8xbf16>, vector<8x128xbf16>, vector<128x128xf32> -> vector<128x128xf32>
    %3 = arith.truncf %2 : vector<128x128xf32> to vector<128x128xbf16>
    %cst_3 = arith.constant 0.000000e+00 : bf16
    %4 = vector.broadcast %cst_3 : bf16 to vector<128x128xbf16>
    %5 = arith.maximumf %3, %4 : vector<128x128xbf16>
    %c0_4 = arith.constant 0 : index
    %c0_5 = arith.constant 0 : index
    %6 = vector.load %arg3[%c0_4, %c0_5] : memref<64x128xbf16, #tpu.memory_space<vmem>>, vector<64x128xbf16>
    %cst_6 = arith.constant dense<0.000000e+00> : vector<64x128xf32>
    %7 = tpu.matmul %6, %5, %cst_6 {dimension_numbers = #tpu.dot_dimension_numbers<[1], [0], [0], [1], [0, 0, 1, 1], [], []>} : vector<64x128xbf16>, vector<128x128xbf16>, vector<64x128xf32> -> vector<64x128xf32>
    %8 = arith.truncf %7 : vector<64x128xf32> to vector<64x128xbf16>
    %c0_7 = arith.constant 0 : index
    %c0_8 = arith.constant 0 : index
    %9 = vector.load %arg4[%c0_7, %c0_8] : memref<64x1xbf16, #tpu.memory_space<vmem>>, vector<64x1xbf16>
    %10 = vector.broadcast %9 : vector<64x1xbf16> to vector<64x128xbf16>
    %11 = arith.addf %8, %10 : vector<64x128xbf16>
    %cst_9 = arith.constant 0.000000e+00 : bf16
    %12 = vector.broadcast %cst_9 : bf16 to vector<64x128xbf16>
    %13 = arith.maximumf %11, %12 : vector<64x128xbf16>
    %c0_10 = arith.constant 0 : index
    %c0_11 = arith.constant 0 : index
    %14 = vector.load %arg5[%c0_10, %c0_11] : memref<1x64xbf16, #tpu.memory_space<vmem>>, vector<1x64xbf16>
    %cst_12 = arith.constant dense<0.000000e+00> : vector<1x128xf32>
    %15 = tpu.matmul %14, %13, %cst_12 {dimension_numbers = #tpu.dot_dimension_numbers<[1], [0], [0], [1], [0, 0, 1, 1], [], []>} : vector<1x64xbf16>, vector<64x128xbf16>, vector<1x128xf32> -> vector<1x128xf32>
    %c0_13 = arith.constant 0 : index
    %c0_14 = arith.constant 0 : index
    %16 = vector.load %arg6[%c0_13, %c0_14] : memref<1x1xf32, #tpu.memory_space<vmem>>, vector<1x1xf32>
    %17 = vector.broadcast %16 : vector<1x1xf32> to vector<1x128xf32>
    %18 = arith.addf %15, %17 : vector<1x128xf32>
    %cst_15 = arith.constant 0.000000e+00 : f32
    %19 = vector.broadcast %cst_15 : f32 to vector<1x128xf32>
    %20 = arith.maximumf %18, %19 : vector<1x128xf32>
    %c0_16 = arith.constant 0 : index
    %c0_17 = arith.constant 0 : index
    %21 = vector.load %arg7[%c0_16, %c0_17] : memref<1x128xf32, #tpu.memory_space<vmem>>, vector<1x128xf32>
    tpu.vector_store %arg7[%c0_16, %c0_17], %20 {strides = array<i32>} : memref<1x128xf32, #tpu.memory_space<vmem>>, vector<1x128xf32>,
    return
  }
  func.func @transform_0(%arg0: i32) -> (i32, i32) {
    %c0_i32 = arith.constant 0 : i32
    %c0_i32_0 = arith.constant 0 : i32
    return %c0_i32, %arg0 : i32, i32
  }
  func.func @transform_1(%arg0: i32) -> (i32, i32) {
    %c0_i32 = arith.constant 0 : i32
    %c0_i32_0 = arith.constant 0 : i32
    %c0_i32_1 = arith.constant 0 : i32
    return %c0_i32, %c0_i32_0 : i32, i32
  }
  func.func @transform_2(%arg0: i32) -> (i32, i32) {
    %c0_i32 = arith.constant 0 : i32
    %c0_i32_0 = arith.constant 0 : i32
    %c0_i32_1 = arith.constant 0 : i32
    return %c0_i32, %c0_i32_0 : i32, i32
  }
  func.func @transform_3(%arg0: i32) -> (i32, i32) {
    %c0_i32 = arith.constant 0 : i32
    %c0_i32_0 = arith.constant 0 : i32
    %c0_i32_1 = arith.constant 0 : i32
    return %c0_i32, %c0_i32_0 : i32, i32
  }
  func.func @transform_4(%arg0: i32) -> (i32, i32) {
    %c0_i32 = arith.constant 0 : i32
    %c0_i32_0 = arith.constant 0 : i32
    %c0_i32_1 = arith.constant 0 : i32
    return %c0_i32, %c0_i32_0 : i32, i32
  }
  func.func @transform_5(%arg0: i32) -> (i32, i32) {
    %c0_i32 = arith.constant 0 : i32
    %c0_i32_0 = arith.constant 0 : i32
    %c0_i32_1 = arith.constant 0 : i32
    return %c0_i32, %c0_i32_0 : i32, i32
  }
  func.func @transform_6(%arg0: i32) -> (i32, i32) {
    %c0_i32 = arith.constant 0 : i32
    %c0_i32_0 = arith.constant 0 : i32
    return %c0_i32, %arg0 : i32, i32
  }
}

</mosaic_0001>

<llo_original>
// kernel: tpu_custom_call.1
$region0: #{tpu_custom_call.1}
  #allocation0 [shape = 'u32[]', space=smem, size = 0x4, offset = 0x4, fixed_abs, tag = 'smem constant byte address 0x4 - core index']
  #allocation1 [shape = 'u32[144,128]{1,0:T(1,128)}', space=vmem, size = 0x12000, scoped, tag = 'internal scratch']
  #allocation2 [shape = 'f32[1,1]{1,0:T(1,128)S(1)}', space=vmem, size = 0x200, scoped, tag = 'scoped memory for tpu_custom_call.1']
  %s0 = inlined_call_operand.vmem [shape: bf16[8,128], index: 0, kind: input, shape index: {}]
  %s1 = inlined_call_operand.vmem [shape: bf16[128,8], index: 1, kind: input, shape index: {}]
  %s2 = inlined_call_operand.vmem [shape: bf16[64,128], index: 2, kind: input, shape index: {}]
  %s3 = inlined_call_operand.vmem [shape: bf16[64,1], index: 3, kind: input, shape index: {}]
  %s4 = inlined_call_operand.vmem [shape: bf16[1,64], index: 4, kind: input, shape index: {}]
  %s5 = inlined_call_operand.<no memory space> [shape: f32[1,1], index: 5, kind: input, shape index: {}]
  %s6 = inlined_call_operand.hbm [shape: f32[1,128], index: 6, kind: output, shape index: {}]
  %s7 = sld [smem:[#allocation0]]
  $region34: #{tpu_custom_call.1} parent=0
    _
  %s9 = ssub.s32 1, %s7
  %s10 = scalar_select 0, %s9, %s7
  %v11 = vstv %s5
  %12 = vst [vmem:[#allocation2] sm:$0x1] %v11
  $region1: #{tpu_custom_call.1} parent=0
    #allocation3 [shape = 'u8[512]{0}', space=vmem, size = 0x400, scoped, tag = 'output window, operand 0, single buffered']
    #allocation4 [shape = 's32[1]{0}', space=sflag, size = 0x4, scoped, tag = 'scoped memory for tpu_custom_call.1']
    %13 = vsyncpa [#allocation4], 0
    // Predicated region
    $region2: #{tpu_custom_call.1} parent=1 // pred_check
      _
    $region3: #{tpu_custom_call.1} parent=1 // pred_check_branch
      %15 = sbr.rel (0) target = $region5
    $region4: #{tpu_custom_call.1} parent=1 // pred_region
      _
    $region5: #{tpu_custom_call.1} parent=1 // pred_fallthru
      _
    // Predicated region
    $region6: #{tpu_custom_call.1} parent=1 // pred_check
      _
    $region7: #{tpu_custom_call.1} parent=1 // pred_check_branch
      %17 = sbr.rel (0) target = $region9
    $region8: #{tpu_custom_call.1} parent=1 // pred_region
      _
    $region9: #{tpu_custom_call.1} parent=1 // pred_fallthru
      _
    // Predicated region
    $region10: #{tpu_custom_call.1} parent=1 // pred_check
      _
    $region11: #{tpu_custom_call.1} parent=1 // pred_check_branch
      %19 = sbr.rel (0) target = $region13
    $region12: #{tpu_custom_call.1} parent=1 // pred_region
      _
    $region13: #{tpu_custom_call.1} parent=1 // pred_fallthru
      _
    // Predicated region
    $region14: #{tpu_custom_call.1} parent=1 // pred_check
      _
    $region15: #{tpu_custom_call.1} parent=1 // pred_check_branch
      %21 = sbr.rel (0) target = $region17
    $region16: #{tpu_custom_call.1} parent=1 // pred_region
      _
    $region17: #{tpu_custom_call.1} parent=1 // pred_fallthru
      _
    // Predicated region
    $region18: #{tpu_custom_call.1} parent=1 // pred_check
      _
    $region19: #{tpu_custom_call.1} parent=1 // pred_check_branch
      %23 = sbr.rel (0) target = $region21
    $region20: #{tpu_custom_call.1} parent=1 // pred_region
      _
    $region21: #{tpu_custom_call.1} parent=1 // pred_fallthru
      _
    // Predicated region
    $region22: #{tpu_custom_call.1} parent=1 // pred_check
      _
    $region23: #{tpu_custom_call.1} parent=1 // pred_check_branch
      %25 = sbr.rel (0) target = $region25
    $region24: #{tpu_custom_call.1} parent=1 // pred_region
      _
    $region25: #{tpu_custom_call.1} parent=1 // pred_fallthru
      _
    %v27 = vld [vmem:[%s0] sm:$0xf]
    %v28 = vld [vmem:[%s1] sm:$0xf]
    %v29 = vld [vmem:[%s1 + $0x4] sm:$0xf]
    %v30 = vld [vmem:[%s1 + $0x8] sm:$0xf]
    %v31 = vld [vmem:[%s1 + $0xc] sm:$0xf]
    %v32 = vld [vmem:[%s1 + $0x10] sm:$0xf]
    %v33 = vld [vmem:[%s1 + $0x14] sm:$0xf]
    %v34 = vld [vmem:[%s1 + $0x18] sm:$0xf]
    %v35 = vld [vmem:[%s1 + $0x1c] sm:$0xf]
    %v36 = vld [vmem:[%s1 + $0x20] sm:$0xf]
    %v37 = vld [vmem:[%s1 + $0x24] sm:$0xf]
    %v38 = vld [vmem:[%s1 + $0x28] sm:$0xf]
    %v39 = vld [vmem:[%s1 + $0x2c] sm:$0xf]
    %v40 = vld [vmem:[%s1 + $0x30] sm:$0xf]
    %v41 = vld [vmem:[%s1 + $0x34] sm:$0xf]
    %v42 = vld [vmem:[%s1 + $0x38] sm:$0xf]
    %v43 = vld [vmem:[%s1 + $0x3c] sm:$0xf]
    %v60 = vunpack.c.l.b16 %v28
    %v61 = vunpack.c.l.b16 %v29
    %v62 = vunpack.c.l.b16 %v30
    %v63 = vunpack.c.l.b16 %v31
    %v64 = vunpack.c.l.b16 %v32
    %v65 = vunpack.c.l.b16 %v33
    %v66 = vunpack.c.l.b16 %v34
    %v67 = vunpack.c.l.b16 %v35
    %v68 = vunpack.c.l.b16 %v36
    %v69 = vunpack.c.l.b16 %v37
    %v70 = vunpack.c.l.b16 %v38
    %v71 = vunpack.c.l.b16 %v39
    %v72 = vunpack.c.l.b16 %v40
    %v73 = vunpack.c.l.b16 %v41
    %v74 = vunpack.c.l.b16 %v42
    %v75 = vunpack.c.l.b16 %v43
    %v76 = vpack.c.b16 %v61, %v60
    %v77 = vpack.c.b16 %v63, %v62
    %v78 = vpack.c.b16 %v65, %v64
    %v79 = vpack.c.b16 %v67, %v66
    %v80 = vpack.c.b16 %v69, %v68
    %v81 = vpack.c.b16 %v71, %v70
    %v82 = vpack.c.b16 %v73, %v72
    %v83 = vpack.c.b16 %v75, %v74
    %vm84 = vcmask 64512
    %v86 = vsel %vm84, %v76, 0
    %v89 = vsel %vm84, %v77, 0
    %v92 = vsel %vm84, %v78, 0
    %v95 = vsel %vm84, %v79, 0
    %v98 = vsel %vm84, %v80, 0
    %v101 = vsel %vm84, %v81, 0
    %v104 = vsel %vm84, %v82, 0
    %v107 = vsel %vm84, %v83, 0
    %vm109 = vcmask 1043456
    %v111 = vsel %vm109, %v27, 0
    %113 = vmatprep.subr.bf16.mxu0 0
    %114 = vmatpush1.bf16.msra.mxu0 %v111
    %115 = vmatprep.subr.bf16.mxu0 0
    %116 = vmatpush1.bf16.msra.mxu0 0
    %117 = vmatprep.subr.bf16.mxu0 0
    %118 = vmatpush1.bf16.msra.mxu0 0
    %119 = vmatprep.subr.bf16.mxu0 0
    %120 = vmatpush1.bf16.msra.mxu0 0
    %121 = vmatprep.subr.bf16.mxu0 0
    %122 = vmatpush1.bf16.msra.mxu0 0
    %123 = vmatprep.subr.bf16.mxu0 0
    %124 = vmatpush1.bf16.msra.mxu0 0
    %125 = vmatprep.subr.bf16.mxu0 0
    %126 = vmatpush1.bf16.msra.mxu0 0
    %127 = vmatprep.subr.bf16.mxu0 0
    %128 = vmatpush1.bf16.msra.mxu0 0
    %129 = vmatprep.subr.bf16.mxu0 0
    %130 = vmatpush1.bf16.msra.mxu0 0
    %131 = vmatprep.subr.bf16.mxu0 0
    %132 = vmatpush1.bf16.msra.mxu0 0
    %133 = vmatprep.subr.bf16.mxu0 0
    %134 = vmatpush1.bf16.msra.mxu0 0
    %135 = vmatprep.subr.bf16.mxu0 0
    %136 = vmatpush1.bf16.msra.mxu0 0
    %137 = vmatprep.subr.bf16.mxu0 0
    %138 = vmatpush1.bf16.msra.mxu0 0
    %139 = vmatprep.subr.bf16.mxu0 0
    %140 = vmatpush1.bf16.msra.mxu0 0
    %141 = vmatprep.subr.bf16.mxu0 0
    %142 = vmatpush1.bf16.msra.mxu0 0
    %143 = vmatprep.subr.bf16.mxu0 0
    %144 = vmatpush1.bf16.msra.mxu0 0
    %145 = vmatprep.mubr.bf16.mxu0 0
    %146 = vmatmul.mubr.bf16.gmra.mrb[0].mxu0 %v86
    %v147 = vpop.f32.mrb[0].mxu0
    %v148 = vadd.f32 0.0, %v147
    %v149 = vpop.f32.mrb[0].mxu0
    %v150 = vpop.f32.mrb[0].mxu0
    %v151 = vadd.f32 0.0, %v150
    %v152 = vpop.f32.mrb[0].mxu0
    %153 = vmatprep.mubr.bf16.mxu0 0
    %154 = vmatmul.mubr.bf16.gmra.mrb[0].mxu0 %v89
    %v155 = vpop.f32.mrb[0].mxu0
    %v156 = vadd.f32 0.0, %v155
    %v157 = vpop.f32.mrb[0].mxu0
    %v158 = vpop.f32.mrb[0].mxu0
    %v159 = vadd.f32 0.0, %v158
    %v160 = vpop.f32.mrb[0].mxu0
    %161 = vmatprep.mubr.bf16.mxu0 0
    %162 = vmatmul.mubr.bf16.gmra.mrb[0].mxu0 %v92
    %v163 = vpop.f32.mrb[0].mxu0
    %v164 = vadd.f32 0.0, %v163
    %v165 = vpop.f32.mrb[0].mxu0
    %v166 = vpop.f32.mrb[0].mxu0
    %v167 = vadd.f32 0.0, %v166
    %v168 = vpop.f32.mrb[0].mxu0
    %169 = vmatprep.mubr.bf16.mxu0 0
    %170 = vmatmul.mubr.bf16.gmra.mrb[0].mxu0 %v95
    %v171 = vpop.f32.mrb[0].mxu0
    %v172 = vadd.f32 0.0, %v171
    %v173 = vpop.f32.mrb[0].mxu0
    %v174 = vpop.f32.mrb[0].mxu0
    %v175 = vadd.f32 0.0, %v174
    %v176 = vpop.f32.mrb[0].mxu0
    %177 = vmatprep.mubr.bf16.mxu0 0
    %178 = vmatmul.mubr.bf16.gmra.mrb[0].mxu0 %v98
    %v179 = vpop.f32.mrb[0].mxu0
    %v180 = vadd.f32 0.0, %v179
    %v181 = vpop.f32.mrb[0].mxu0
    %v182 = vpop.f32.mrb[0].mxu0
    %v183 = vadd.f32 0.0, %v182
    %v184 = vpop.f32.mrb[0].mxu0
    %185 = vmatprep.mubr.bf16.mxu0 0
    %186 = vmatmul.mubr.bf16.gmra.mrb[0].mxu0 %v101
    %v187 = vpop.f32.mrb[0].mxu0
    %v188 = vadd.f32 0.0, %v187
    %v189 = vpop.f32.mrb[0].mxu0
    %v190 = vpop.f32.mrb[0].mxu0
    %v191 = vadd.f32 0.0, %v190
    %v192 = vpop.f32.mrb[0].mxu0
    %193 = vmatprep.mubr.bf16.mxu0 0
    %194 = vmatmul.mubr.bf16.gmra.mrb[0].mxu0 %v104
    %v195 = vpop.f32.mrb[0].mxu0
    %v196 = vadd.f32 0.0, %v195
    %v197 = vpop.f32.mrb[0].mxu0
    %v198 = vpop.f32.mrb[0].mxu0
    %v199 = vadd.f32 0.0, %v198
    %v200 = vpop.f32.mrb[0].mxu0
    %201 = vmatprep.mubr.bf16.mxu0 0
    %202 = vmatmul.mubr.bf16.gmra.mrb[0].mxu0 %v107
    %v203 = vpop.f32.mrb[0].mxu0
    %v204 = vadd.f32 0.0, %v203
    %v205 = vpop.f32.mrb[0].mxu0
    %v206 = vpop.f32.mrb[0].mxu0
    %v207 = vadd.f32 0.0, %v206
    %v208 = vpop.f32.mrb[0].mxu0
    %209 = vdwg.mxu0
    %v210 = vpack.c.bf16 %v151, %v148
    %v211 = vpack.c.bf16 %v159, %v156
    %v212 = vpack.c.bf16 %v167, %v164
    %v213 = vpack.c.bf16 %v175, %v172
    %v214 = vpack.c.bf16 %v183, %v180
    %v215 = vpack.c.bf16 %v191, %v188
    %v216 = vpack.c.bf16 %v199, %v196
    %v217 = vpack.c.bf16 %v207, %v204
    %v218 = vmax.bf16 %v210, 0
    %v219 = vmax.bf16 %v211, 0
    %v220 = vmax.bf16 %v212, 0
    %v221 = vmax.bf16 %v213, 0
    %v222 = vmax.bf16 %v214, 0
    %v223 = vmax.bf16 %v215, 0
    %v224 = vmax.bf16 %v216, 0
    %v225 = vmax.bf16 %v217, 0
    %v226 = vld [vmem:[%s2] sm:$0xf]
    %v227 = vld [vmem:[%s2 + $0x4] sm:$0xf]
    %v228 = vld [vmem:[%s2 + $0x8] sm:$0xf]
    %v229 = vld [vmem:[%s2 + $0xc] sm:$0xf]
    %v230 = vld [vmem:[%s2 + $0x10] sm:$0xf]
    %v231 = vld [vmem:[%s2 + $0x14] sm:$0xf]
    %v232 = vld [vmem:[%s2 + $0x18] sm:$0xf]
    %v233 = vld [vmem:[%s2 + $0x1c] sm:$0xf]
    %v242 = vunpack.c.l.b16 %v226
    %v243 = vunpack.c.l.b16 %v227
    %v244 = vunpack.c.l.b16 %v228
    %v245 = vunpack.c.l.b16 %v229
    %v246 = vunpack.c.l.b16 %v230
    %v247 = vunpack.c.l.b16 %v231
    %v248 = vunpack.c.l.b16 %v232
    %v249 = vunpack.c.l.b16 %v233
    %v250 = vpack.c.b16 %v243, %v242
    %v251 = vpack.c.b16 %v245, %v244
    %v252 = vpack.c.b16 %v247, %v246
    %v253 = vpack.c.b16 %v249, %v248
    %258 = vmatprep.subr.bf16.mxu0 0
    %259 = vmatpush1.bf16.msra.mxu0 %v218
    %260 = vmatprep.subr.bf16.mxu0 0
    %261 = vmatpush1.bf16.msra.mxu0 %v219
    %262 = vmatprep.subr.bf16.mxu0 0
    %263 = vmatpush1.bf16.msra.mxu0 %v220
    %264 = vmatprep.subr.bf16.mxu0 0
    %265 = vmatpush1.bf16.msra.mxu0 %v221
    %266 = vmatprep.subr.bf16.mxu0 0
    %267 = vmatpush1.bf16.msra.mxu0 %v222
    %268 = vmatprep.subr.bf16.mxu0 0
    %269 = vmatpush1.bf16.msra.mxu0 %v223
    %270 = vmatprep.subr.bf16.mxu0 0
    %271 = vmatpush1.bf16.msra.mxu0 %v224
    %272 = vmatprep.subr.bf16.mxu0 0
    %273 = vmatpush1.bf16.msra.mxu0 %v225
    %274 = vmatprep.subr.bf16.mxu0 0
    %275 = vmatpush1.bf16.msra.mxu0 0
    %276 = vmatprep.subr.bf16.mxu0 0
    %277 = vmatpush1.bf16.msra.mxu0 0
    %278 = vmatprep.subr.bf16.mxu0 0
    %279 = vmatpush1.bf16.msra.mxu0 0
    %280 = vmatprep.subr.bf16.mxu0 0
    %281 = vmatpush1.bf16.msra.mxu0 0
    %282 = vmatprep.subr.bf16.mxu0 0
    %283 = vmatpush1.bf16.msra.mxu0 0
    %284 = vmatprep.subr.bf16.mxu0 0
    %285 = vmatpush1.bf16.msra.mxu0 0
    %286 = vmatprep.subr.bf16.mxu0 0
    %287 = vmatpush1.bf16.msra.mxu0 0
    %288 = vmatprep.subr.bf16.mxu0 0
    %289 = vmatpush1.bf16.msra.mxu0 0
    %290 = vmatprep.mubr.bf16.mxu0 0
    %291 = vmatmul.mubr.bf16.gmra.mrb[0].mxu0 %v250
    %v292 = vpop.f32.mrb[0].mxu0
    %v293 = vadd.f32 0.0, %v292
    %v294 = vpop.f32.mrb[0].mxu0
    %v295 = vpop.f32.mrb[0].mxu0
    %v296 = vadd.f32 0.0, %v295
    %v297 = vpop.f32.mrb[0].mxu0
    %298 = vmatprep.mubr.bf16.mxu0 0
    %299 = vmatmul.mubr.bf16.gmra.mrb[0].mxu0 %v251
    %v300 = vpop.f32.mrb[0].mxu0
    %v301 = vadd.f32 0.0, %v300
    %v302 = vpop.f32.mrb[0].mxu0
    %v303 = vpop.f32.mrb[0].mxu0
    %v304 = vadd.f32 0.0, %v303
    %v305 = vpop.f32.mrb[0].mxu0
    %306 = vmatprep.mubr.bf16.mxu0 0
    %307 = vmatmul.mubr.bf16.gmra.mrb[0].mxu0 %v252
    %v308 = vpop.f32.mrb[0].mxu0
    %v309 = vadd.f32 0.0, %v308
    %v310 = vpop.f32.mrb[0].mxu0
    %v311 = vpop.f32.mrb[0].mxu0
    %v312 = vadd.f32 0.0, %v311
    %v313 = vpop.f32.mrb[0].mxu0
    %314 = vmatprep.mubr.bf16.mxu0 0
    %315 = vmatmul.mubr.bf16.gmra.mrb[0].mxu0 %v253
    %v316 = vpop.f32.mrb[0].mxu0
    %v317 = vadd.f32 0.0, %v316
    %v318 = vpop.f32.mrb[0].mxu0
    %v319 = vpop.f32.mrb[0].mxu0
    %v320 = vadd.f32 0.0, %v319
    %v321 = vpop.f32.mrb[0].mxu0
    %322 = vdwg.mxu0
    %v323 = vpack.c.bf16 %v296, %v293
    %v324 = vpack.c.bf16 %v304, %v301
    %v325 = vpack.c.bf16 %v312, %v309
    %v326 = vpack.c.bf16 %v320, %v317
    %v327 = vld [vmem:[%s3] sm:$0xf]
    %v328 = vld [vmem:[%s3 + $0x4] sm:$0xf]
    %v329 = vld [vmem:[%s3 + $0x8] sm:$0xf]
    %v330 = vld [vmem:[%s3 + $0xc] sm:$0xf]
    %v331 = vld [vmem:[%s3 + $0x10] sm:$0xf]
    %v332 = vld [vmem:[%s3 + $0x14] sm:$0xf]
    %v333 = vld [vmem:[%s3 + $0x18] sm:$0xf]
    %v334 = vld [vmem:[%s3 + $0x1c] sm:$0xf]
    %336 = vset.pattern.permute.xlu0 0
    %337 = vperm.xlu0 %336, %v327
    %v338 = vpop.permute.xlu0 %337
    %v341 = vunpack.c.l.s4 839922192
    %v342 = vunpack.c.0.s8 %v341
    %v343 = vlaneseq
    %v344 = vshrl.u32 %v343, 7
    %v345 = vsub.s32 %v342, %v344
    %v346 = vrot.slane %v338, %v345
    %348 = vset.pattern.permute.xlu0 0
    %349 = vperm.xlu0 %348, %v328
    %v350 = vpop.permute.xlu0 %349
    %v353 = vunpack.c.l.s4 839922192
    %v354 = vunpack.c.0.s8 %v353
    %v355 = vlaneseq
    %v356 = vshrl.u32 %v355, 7
    %v357 = vsub.s32 %v354, %v356
    %v358 = vrot.slane %v350, %v357
    %360 = vset.pattern.permute.xlu0 0
    %361 = vperm.xlu0 %360, %v329
    %v362 = vpop.permute.xlu0 %361
    %v365 = vunpack.c.l.s4 839922192
    %v366 = vunpack.c.0.s8 %v365
    %v367 = vlaneseq
    %v368 = vshrl.u32 %v367, 7
    %v369 = vsub.s32 %v366, %v368
    %v370 = vrot.slane %v362, %v369
    %372 = vset.pattern.permute.xlu0 0
    %373 = vperm.xlu0 %372, %v330
    %v374 = vpop.permute.xlu0 %373
    %v377 = vunpack.c.l.s4 839922192
    %v378 = vunpack.c.0.s8 %v377
    %v379 = vlaneseq
    %v380 = vshrl.u32 %v379, 7
    %v381 = vsub.s32 %v378, %v380
    %v382 = vrot.slane %v374, %v381
    %384 = vset.pattern.permute.xlu0 0
    %385 = vperm.xlu0 %384, %v331
    %v386 = vpop.permute.xlu0 %385
    %v389 = vunpack.c.l.s4 839922192
    %v390 = vunpack.c.0.s8 %v389
    %v391 = vlaneseq
    %v392 = vshrl.u32 %v391, 7
    %v393 = vsub.s32 %v390, %v392
    %v394 = vrot.slane %v386, %v393
    %396 = vset.pattern.permute.xlu0 0
    %397 = vperm.xlu0 %396, %v332
    %v398 = vpop.permute.xlu0 %397
    %v401 = vunpack.c.l.s4 839922192
    %v402 = vunpack.c.0.s8 %v401
    %v403 = vlaneseq
    %v404 = vshrl.u32 %v403, 7
    %v405 = vsub.s32 %v402, %v404
    %v406 = vrot.slane %v398, %v405
    %408 = vset.pattern.permute.xlu0 0
    %409 = vperm.xlu0 %408, %v333
    %v410 = vpop.permute.xlu0 %409
    %v413 = vunpack.c.l.s4 839922192
    %v414 = vunpack.c.0.s8 %v413
    %v415 = vlaneseq
    %v416 = vshrl.u32 %v415, 7
    %v417 = vsub.s32 %v414, %v416
    %v418 = vrot.slane %v410, %v417
    %420 = vset.pattern.permute.xlu0 0
    %421 = vperm.xlu0 %420, %v334
    %v422 = vpop.permute.xlu0 %421
    %v425 = vunpack.c.l.s4 839922192
    %v426 = vunpack.c.0.s8 %v425
    %v427 = vlaneseq
    %v428 = vshrl.u32 %v427, 7
    %v429 = vsub.s32 %v426, %v428
    %v430 = vrot.slane %v422, %v429
    %v439 = vunpack.c.l.b16 %v346
    %v440 = vunpack.c.l.b16 %v358
    %v441 = vunpack.c.l.b16 %v370
    %v442 = vunpack.c.l.b16 %v382
    %v443 = vunpack.c.l.b16 %v394
    %v444 = vunpack.c.l.b16 %v406
    %v445 = vunpack.c.l.b16 %v418
    %v446 = vunpack.c.l.b16 %v430
    %v447 = vpack.c.b16 %v440, %v439
    %v448 = vpack.c.b16 %v442, %v441
    %v449 = vpack.c.b16 %v444, %v443
    %v450 = vpack.c.b16 %v446, %v445
    %v455 = vadd.bf16 %v323, %v447
    %v456 = vadd.bf16 %v324, %v448
    %v457 = vadd.bf16 %v325, %v449
    %v458 = vadd.bf16 %v326, %v450
    %v459 = vmax.bf16 %v455, 0
    %v460 = vmax.bf16 %v456, 0
    %v461 = vmax.bf16 %v457, 0
    %v462 = vmax.bf16 %v458, 0
    %v463 = vld [vmem:[%s4] sm:$0x1]
    %v464 = vld [vmem:[#allocation2] sm:$0x1]
    %466 = vset.pattern.permute.xlu0 0
    %467 = vperm.xlu0 %466, %v464
    %v468 = vpop.permute.xlu0 %467
    %v470 = vlaneseq
    %v471 = vshrl.u32 %v470, 7
    %v472 = vsub.s32 0, %v471
    %v473 = vrot.slane %v468, %v472
    %vm474 = vcmask 523264
    %v476 = vsel %vm474, %v463, 0
    %478 = vmatprep.subr.bf16.mxu0 0
    %479 = vmatpush1.bf16.msra.mxu0 %v459
    %480 = vmatprep.subr.bf16.mxu0 0
    %481 = vmatpush1.bf16.msra.mxu0 %v460
    %482 = vmatprep.subr.bf16.mxu0 0
    %483 = vmatpush1.bf16.msra.mxu0 %v461
    %484 = vmatprep.subr.bf16.mxu0 0
    %485 = vmatpush1.bf16.msra.mxu0 %v462
    %486 = vmatprep.subr.bf16.mxu0 0
    %487 = vmatpush1.bf16.msra.mxu0 0
    %488 = vmatprep.subr.bf16.mxu0 0
    %489 = vmatpush1.bf16.msra.mxu0 0
    %490 = vmatprep.subr.bf16.mxu0 0
    %491 = vmatpush1.bf16.msra.mxu0 0
    %492 = vmatprep.subr.bf16.mxu0 0
    %493 = vmatpush1.bf16.msra.mxu0 0
    %494 = vmatprep.subr.bf16.mxu0 0
    %495 = vmatpush1.bf16.msra.mxu0 0
    %496 = vmatprep.subr.bf16.mxu0 0
    %497 = vmatpush1.bf16.msra.mxu0 0
    %498 = vmatprep.subr.bf16.mxu0 0
    %499 = vmatpush1.bf16.msra.mxu0 0
    %500 = vmatprep.subr.bf16.mxu0 0
    %501 = vmatpush1.bf16.msra.mxu0 0
    %502 = vmatprep.subr.bf16.mxu0 0
    %503 = vmatpush1.bf16.msra.mxu0 0
    %504 = vmatprep.subr.bf16.mxu0 0
    %505 = vmatpush1.bf16.msra.mxu0 0
    %506 = vmatprep.subr.bf16.mxu0 0
    %507 = vmatpush1.bf16.msra.mxu0 0
    %508 = vmatprep.subr.bf16.mxu0 0
    %509 = vmatpush1.bf16.msra.mxu0 0
    %510 = vmatprep.mubr.bf16.mxu0 0
    %511 = vmatmul.mubr.bf16.gmra.mrb[0].mxu0 %v476
    %v512 = vpop.f32.mrb[0].mxu0
    %v513 = vadd.f32 %v473, %v512
    %v514 = vpop.f32.mrb[0].mxu0
    %v515 = vpop.f32.mrb[0].mxu0
    %v516 = vpop.f32.mrb[0].mxu0
    %517 = vdwg.mxu0
    %v518 = vmax.f32 %v513, 0.0
    %519 = vst [vmem:[#allocation3] sm:$0x1] %v518
    // Predicated region
    $region26: #{tpu_custom_call.1} parent=1 // pred_check
      _
    $region27: #{tpu_custom_call.1} parent=1 // pred_check_branch
      %521 = sbr.rel (0) target = $region29
    $region28: #{tpu_custom_call.1} parent=1 // pred_region
      %s523 = ssub.s32 16, 16
      %524 = vsyncadd [#allocation4], %s523
      %s526 = sshll.u32 [#allocation3], 4
      %s527 = int_to_ptr.vmem [resolvable:$true] %s526
      %529 = dma.vmem_to_hbm [thread:$0]  %s527, 16, %s6, [#allocation4]
    $region29: #{tpu_custom_call.1} parent=1 // pred_fallthru
      _
    // Predicated region
    $region30: #{tpu_custom_call.1} parent=1 // pred_check
      _
    $region31: #{tpu_custom_call.1} parent=1 // pred_check_branch
      %531 = sbr.rel (0) target = $region33
    $region32: #{tpu_custom_call.1} parent=1 // pred_region
      %532 = dma.done [#allocation4], 16
    $region33: #{tpu_custom_call.1} parent=1 // pred_fallthru
      _
    %533 = vsyncpa [#allocation4], 1

</llo_original>
